<compile_context>
chip_gen: v5e
topology: v5e:2x2
jax: 0.10.0
libtpu: 0.0.40
codegen_flags: <defaults>
</compile_context>

<pallas_src>
import numpy as np
import jax
import jax.numpy as jnp
from jax import lax
from jax.experimental import pallas as pl
from jax.experimental.pallas import tpu as pltpu

# ----------------------- small ConvE configuration -----------------------
B = 2                    # real batch for the demo
NUM_ENTITIES = 256
NUM_RELATIONS = 16
EMB_DIM = 32             # cfg['embedding_dim']
EMB_SHAPE1 = 4           # cfg['embedding_shape1']
EMB_SHAPE2 = EMB_DIM // EMB_SHAPE1            # 8
CONV_CH = 32
KH = KW = 3
H_IN, W_IN = 2 * EMB_SHAPE1, EMB_SHAPE2       # stacked input 8 x 8
H_OUT, W_OUT = H_IN - KH + 1, W_IN - KW + 1   # 6 x 6 (VALID conv)
HIDDEN = CONV_CH * H_OUT * W_OUT              # 1152 == cfg['hidden_size']
IN_FLAT = H_IN * W_IN                         # 64
BN_EPS = 1e-5
B_TILE = 8               # batch rows per grid step (raise to 64-256 for serving batches)


# ----------------------------- Pallas kernel -----------------------------
def make_conve_kernel(b_tile):
    """Fused ConvE forward for one batch tile:
         gather x rows from emb_e / emb_rel (indices from SMEM scalar prefetch)
         a = relu(x @ W1 + b1)          # conv-as-Toeplitz, bn0/bn1/conv_b folded
         h = relu(a @ W2 + b2)          # fc, bn2 folded
         out = sigmoid(h @ emb_e.T + b) # score all entities
    """
    def kernel(e1_ref, rel_ref,                          # scalar prefetch (SMEM)
               emb_e_ref, emb_rel_ref, w1_ref, b1_ref,   # VMEM-resident weights
               w2_ref, b2_ref, embT_ref, eb_ref,
               out_ref,                                  # (b_tile, NUM_ENTITIES)
               x_scr):                                   # VMEM scratch (b_tile, IN_FLAT)
        base = pl.program_id(0) * b_tile
        # In-kernel embedding gather + stack.  PyTorch's reshape-to-(4,8),
        # concat along H, NCHW flatten equals concat([emb_e[e1], emb_rel[rel]])
        # along the feature axis, so each row is two 32-wide row reads.
        for r in range(b_tile):
            e_idx = e1_ref[base + r]
            r_idx = rel_ref[base + r]
            x_scr[pl.ds(r, 1), pl.ds(0, EMB_DIM)] = emb_e_ref[pl.ds(e_idx, 1), :]
            x_scr[pl.ds(r, 1), pl.ds(EMB_DIM, EMB_DIM)] = emb_rel_ref[pl.ds(r_idx, 1), :]

        a = jnp.maximum(
            jnp.dot(x_scr[...], w1_ref[...], preferred_element_type=jnp.float32)
            + b1_ref[...], 0.0)
        h = jnp.maximum(
            jnp.dot(a, w2_ref[...], preferred_element_type=jnp.float32)
            + b2_ref[...], 0.0)
        logits = jnp.dot(h, embT_ref[...], preferred_element_type=jnp.float32) + eb_ref[...]
        out_ref[...] = jax.nn.sigmoid(logits)
    return kernel


# ------------------------------ wrapper (glue) -----------------------------
def conve_forward_pallas(e1, rel, params, *, b_tile=B_TILE):
    nb = int(e1.shape[0])
    num_tiles = -(-nb // b_tile)
    n_pad = num_tiles * b_tile
    # Pad index vectors with 0 (padding_idx row of emb_e/emb_rel is zeros);
    # padded output rows are sliced off below.
    e1_pad = jnp.zeros((n_pad,), jnp.int32).at[:nb].set(e1.reshape(-1).astype(jnp.int32))
    rel_pad = jnp.zeros((n_pad,), jnp.int32).at[:nb].set(rel.reshape(-1).astype(jnp.int32))

    const2d = lambda t, e1_r, rel_r: (0, 0)   # same block every step -> weights stay VMEM resident
    grid_spec = pltpu.PrefetchScalarGridSpec(
        num_scalar_prefetch=2,
        grid=(num_tiles,),
        in_specs=[
            pl.BlockSpec((NUM_ENTITIES, EMB_DIM), const2d),    # emb_e    (256, 32)
            pl.BlockSpec((NUM_RELATIONS, EMB_DIM), const2d),   # emb_rel  (16, 32)
            pl.BlockSpec((IN_FLAT, HIDDEN), const2d),          # W1       (64, 1152) un-padded
            pl.BlockSpec((1, HIDDEN), const2d),                # b1       (1, 1152)
            pl.BlockSpec((HIDDEN, EMB_DIM), const2d),          # W2       (1152, 32)
            pl.BlockSpec((1, EMB_DIM), const2d),               # b2       (1, 32)
            pl.BlockSpec((EMB_DIM, NUM_ENTITIES), const2d),    # emb_e.T  (32, 256)
            pl.BlockSpec((1, NUM_ENTITIES), const2d),          # entity bias (1, 256)
        ],
        out_specs=pl.BlockSpec((b_tile, NUM_ENTITIES), lambda t, e1_r, rel_r: (t, 0)),
        scratch_shapes=[pltpu.VMEM((b_tile, IN_FLAT), jnp.float32)],
    )
    out = pl.pallas_call(
        make_conve_kernel(b_tile),
        out_shape=jax.ShapeDtypeStruct((n_pad, NUM_ENTITIES), jnp.float32),
        grid_spec=grid_spec,
        compiler_params=pltpu.CompilerParams(dimension_semantics=("parallel",)),
    )(e1_pad, rel_pad,
      params["emb_e"], params["emb_rel"], params["w1"], params["b1_row"],
      params["w2"], params["b2_row"], params["emb_e_t"], params["b_row"])
    return out[:nb]


# -------------------------- parameter construction -------------------------
def fold_bn(gamma, beta, mean, var):
    scale = gamma / jnp.sqrt(var + BN_EPS)
    shift = beta - mean * scale
    return scale, shift


def conv_to_toeplitz(conv_w_np):
    """Build M (64, 1152) so that x_flat @ M == flatten(conv2d_NCHW(x, W), order (oc, i, j))."""
    M = np.zeros((IN_FLAT, HIDDEN), np.float32)
    for oc in range(CONV_CH):
        for i in range(H_OUT):
            for j in range(W_OUT):
                col = oc * (H_OUT * W_OUT) + i * W_OUT + j
                for di in range(KH):
                    for dj in range(KW):
                        M[(i + di) * W_IN + (j + dj), col] = conv_w_np[oc, 0, di, dj]
    return jnp.asarray(M)


def init_params(key):
    ks = jax.random.split(key, 9)
    emb_e = 0.1 * jax.random.normal(ks[0], (NUM_ENTITIES, EMB_DIM), jnp.float32)
    emb_e = emb_e.at[0].set(0.0)                                   # padding_idx=0
    emb_rel = 0.1 * jax.random.normal(ks[1], (NUM_RELATIONS, EMB_DIM), jnp.float32)
    emb_rel = emb_rel.at[0].set(0.0)
    conv_w = 0.1 * jax.random.normal(ks[2], (CONV_CH, 1, KH, KW), jnp.float32)
    conv_b = 0.1 * jax.random.normal(ks[3], (CONV_CH,), jnp.float32)
    fc_w = 0.05 * jax.random.normal(ks[4], (EMB_DIM, HIDDEN), jnp.float32)
    fc_b = 0.05 * jax.random.normal(ks[5], (EMB_DIM,), jnp.float32)
    b = jnp.zeros((NUM_ENTITIES,), jnp.float32)                    # register_parameter('b', zeros)

    def bn_params(k, n):
        k1, k2, k3, k4 = jax.random.split(k, 4)
        gamma = 1.0 + 0.1 * jax.random.normal(k1, (n,), jnp.float32)
        beta = 0.1 * jax.random.normal(k2, (n,), jnp.float32)
        mean = 0.1 * jax.random.normal(k3, (n,), jnp.float32)
        var = jax.random.uniform(k4, (n,), jnp.float32, minval=0.5, maxval=1.5)
        return gamma, beta, mean, var

    bn0 = bn_params(ks[6], 1)
    bn1 = bn_params(ks[7], CONV_CH)
    bn2 = bn_params(ks[8], EMB_DIM)

    # ---- fold everything affine into matmul weights/biases (glue, zero runtime cost) ----
    sc0, sh0 = fold_bn(*bn0)                   # scalars (shape (1,))
    sc1, sh1 = fold_bn(*bn1)                   # (32,)
    sc2, sh2 = fold_bn(*bn2)                   # (32,)
    n_sp = H_OUT * W_OUT                       # 36

    M = conv_to_toeplitz(np.asarray(conv_w))                       # (64, 1152)
    sc1_exp = jnp.repeat(sc1, n_sp)                                # (1152,)
    sh1_exp = jnp.repeat(sh1, n_sp)
    conv_b_exp = jnp.repeat(conv_b, n_sp)

    # bn1(conv(bn0(x)) + conv_b)  ==  x @ W1 + b1   (W1 at natural 64-row width)
    W1 = (sc0[0] * M) * sc1_exp[None, :]                           # (64, 1152)
    b1 = (sh0[0] * jnp.sum(M, axis=0) + conv_b_exp) * sc1_exp + sh1_exp   # (1152,)

    # bn2(fc(a))  ==  a @ W2 + b2
    W2 = fc_w.T * sc2[None, :]                                     # (1152, 32)
    b2 = fc_b * sc2 + sh2                                          # (32,)

    return dict(
        # raw (reference) parameters
        emb_e=emb_e, emb_rel=emb_rel, conv_w=conv_w, conv_b=conv_b,
        fc_w=fc_w, fc_b=fc_b, b=b, bn0=bn0, bn1=bn1, bn2=bn2,
        # kernel-ready folded tensors
        w1=W1,                                                     # (64, 1152)
        b1_row=b1[None, :],                                        # (1, 1152)
        w2=W2,                                                     # (1152, 32)
        b2_row=b2[None, :],                                        # (1, 32)
        emb_e_t=emb_e.T,                                           # (32, 256)
        b_row=b[None, :],                                          # (1, 256)
    )


# ------------------------------ pure-JAX reference ------------------------------
def _bn_eval(x, bn, axis):
    gamma, beta, mean, var = bn
    shape = [1] * x.ndim
    shape[axis] = -1
    scale = (gamma / jnp.sqrt(var + BN_EPS)).reshape(shape)
    shift = (beta - mean * gamma / jnp.sqrt(var + BN_EPS)).reshape(shape)
    return x * scale + shift


def reference_forward(e1, rel, p):
    nb = e1.shape[0]
    e1_emb = p["emb_e"][e1[:, 0]].reshape(-1, 1, EMB_SHAPE1, EMB_SHAPE2)
    rel_emb = p["emb_rel"][rel[:, 0]].reshape(-1, 1, EMB_SHAPE1, EMB_SHAPE2)
    x = jnp.concatenate([e1_emb, rel_emb], axis=2)                  # (B,1,8,8)
    x = _bn_eval(x, p["bn0"], axis=1)
    x = lax.conv_general_dilated(x, p["conv_w"], (1, 1), "VALID",
                                 dimension_numbers=("NCHW", "OIHW", "NCHW"))
    x = x + p["conv_b"][None, :, None, None]
    x = _bn_eval(x, p["bn1"], axis=1)
    x = jnp.maximum(x, 0.0)
    x = x.reshape(nb, -1)
    x = x @ p["fc_w"].T + p["fc_b"]
    x = _bn_eval(x, p["bn2"], axis=1)
    x = jnp.maximum(x, 0.0)
    x = x @ p["emb_e"].T + p["b"]
    return jax.nn.sigmoid(x)


# ----------------------------------- main -----------------------------------
if __name__ == "__main__":
    key = jax.random.PRNGKey(0)
    pkey, e1k, relk = jax.random.split(key, 3)
    params = init_params(pkey)

    e1 = jax.random.randint(e1k, (B, 1), 0, NUM_ENTITIES, dtype=jnp.int32)
    rel = jax.random.randint(relk, (B, 1), 0, NUM_RELATIONS, dtype=jnp.int32)

    pred = conve_forward_pallas(e1, rel, params)
    pred = jax.block_until_ready(pred)

    ref = reference_forward(e1, rel, params)
    err = float(np.max(np.abs(np.asarray(pred) - np.asarray(ref))))
    if not np.allclose(np.asarray(pred), np.asarray(ref), atol=1e-4, rtol=1e-3):
        raise AssertionError(f"Pallas/reference mismatch, max abs err = {err}")
    print("KERNEL_OK")
</pallas_src>

<mosaic_0001>
module attributes {stable_mosaic.version = 11 : i64} {
  func.func @kernel(%arg0: i32, %arg1: memref<8xi32, #tpu.memory_space<smem>>, %arg2: memref<8xi32, #tpu.memory_space<smem>>, %arg3: memref<256x32xf32, #tpu.memory_space<vmem>>, %arg4: memref<16x32xf32, #tpu.memory_space<vmem>>, %arg5: memref<64x1152xf32, #tpu.memory_space<vmem>>, %arg6: memref<1x1152xf32, #tpu.memory_space<vmem>>, %arg7: memref<1152x32xf32, #tpu.memory_space<vmem>>, %arg8: memref<1x32xf32, #tpu.memory_space<vmem>>, %arg9: memref<32x256xf32, #tpu.memory_space<vmem>>, %arg10: memref<1x256xf32, #tpu.memory_space<vmem>>, %arg11: memref<8x256xf32, #tpu.memory_space<vmem>>, %arg12: memref<8x64xf32, #tpu.memory_space<vmem>>) attributes {dimension_semantics = [#tpu.dimension_semantics<parallel>], iteration_bounds = array<i64: 1>, scalar_prefetch = 2 : i64, scratch_operands = 1 : i64, tpu.core_type = #tpu.core_type<tc>, window_params = [{pipeline_mode = #tpu.pipeline_mode<synchronous>, transform_indices = @transform_0, window_bounds = array<i64: 256, 32>}, {pipeline_mode = #tpu.pipeline_mode<synchronous>, transform_indices = @transform_1, window_bounds = array<i64: 16, 32>}, {pipeline_mode = #tpu.pipeline_mode<synchronous>, transform_indices = @transform_2, window_bounds = array<i64: 64, 1152>}, {pipeline_mode = #tpu.pipeline_mode<synchronous>, transform_indices = @transform_3, window_bounds = array<i64: 1, 1152>}, {pipeline_mode = #tpu.pipeline_mode<synchronous>, transform_indices = @transform_4, window_bounds = array<i64: 1152, 32>}, {pipeline_mode = #tpu.pipeline_mode<synchronous>, transform_indices = @transform_5, window_bounds = array<i64: 1, 32>}, {pipeline_mode = #tpu.pipeline_mode<synchronous>, transform_indices = @transform_6, window_bounds = array<i64: 32, 256>}, {pipeline_mode = #tpu.pipeline_mode<synchronous>, transform_indices = @transform_7, window_bounds = array<i64: 1, 256>}, {transform_indices = @transform_8, window_bounds = array<i64: 8, 256>}]} {
    %c8_i32 = arith.constant 8 : i32
    %0 = arith.muli %arg0, %c8_i32 : i32
    %c0_i32 = arith.constant 0 : i32
    %1 = arith.addi %0, %c0_i32 : i32
    %2 = arith.index_cast %1 : i32 to index
    %3 = memref.load %arg1[%2] : memref<8xi32, #tpu.memory_space<smem>>
    %c0_i32_0 = arith.constant 0 : i32
    %4 = arith.addi %0, %c0_i32_0 : i32
    %5 = arith.index_cast %4 : i32 to index
    %6 = memref.load %arg2[%5] : memref<8xi32, #tpu.memory_space<smem>>
    %7 = arith.index_cast %3 : i32 to index
    %c0 = arith.constant 0 : index
    %8 = vector.load %arg3[%7, %c0] : memref<256x32xf32, #tpu.memory_space<vmem>>, vector<1x32xf32>
    %c0_1 = arith.constant 0 : index
    %c0_2 = arith.constant 0 : index
    %9 = vector.load %arg12[%c0_1, %c0_2] : memref<8x64xf32, #tpu.memory_space<vmem>>, vector<1x32xf32>
    tpu.vector_store %arg12[%c0_1, %c0_2], %8 {strides = array<i32>} : memref<8x64xf32, #tpu.memory_space<vmem>>, vector<1x32xf32>,
    %10 = arith.index_cast %6 : i32 to index
    %c0_3 = arith.constant 0 : index
    %11 = vector.load %arg4[%10, %c0_3] : memref<16x32xf32, #tpu.memory_space<vmem>>, vector<1x32xf32>
    %c0_4 = arith.constant 0 : index
    %c32 = arith.constant 32 : index
    %12 = vector.load %arg12[%c0_4, %c32] : memref<8x64xf32, #tpu.memory_space<vmem>>, vector<1x32xf32>
    tpu.vector_store %arg12[%c0_4, %c32], %11 {strides = array<i32>} : memref<8x64xf32, #tpu.memory_space<vmem>>, vector<1x32xf32>,
    %c1_i32 = arith.constant 1 : i32
    %13 = arith.addi %0, %c1_i32 : i32
    %14 = arith.index_cast %13 : i32 to index
    %15 = memref.load %arg1[%14] : memref<8xi32, #tpu.memory_space<smem>>
    %c1_i32_5 = arith.constant 1 : i32
    %16 = arith.addi %0, %c1_i32_5 : i32
    %17 = arith.index_cast %16 : i32 to index
    %18 = memref.load %arg2[%17] : memref<8xi32, #tpu.memory_space<smem>>
    %19 = arith.index_cast %15 : i32 to index
    %c0_6 = arith.constant 0 : index
    %20 = vector.load %arg3[%19, %c0_6] : memref<256x32xf32, #tpu.memory_space<vmem>>, vector<1x32xf32>
    %c1 = arith.constant 1 : index
    %c0_7 = arith.constant 0 : index
    %21 = vector.load %arg12[%c1, %c0_7] : memref<8x64xf32, #tpu.memory_space<vmem>>, vector<1x32xf32>
    tpu.vector_store %arg12[%c1, %c0_7], %20 {strides = array<i32>} : memref<8x64xf32, #tpu.memory_space<vmem>>, vector<1x32xf32>,
    %22 = arith.index_cast %18 : i32 to index
    %c0_8 = arith.constant 0 : index
    %23 = vector.load %arg4[%22, %c0_8] : memref<16x32xf32, #tpu.memory_space<vmem>>, vector<1x32xf32>
    %c1_9 = arith.constant 1 : index
    %c32_10 = arith.constant 32 : index
    %24 = vector.load %arg12[%c1_9, %c32_10] : memref<8x64xf32, #tpu.memory_space<vmem>>, vector<1x32xf32>
    tpu.vector_store %arg12[%c1_9, %c32_10], %23 {strides = array<i32>} : memref<8x64xf32, #tpu.memory_space<vmem>>, vector<1x32xf32>,
    %c2_i32 = arith.constant 2 : i32
    %25 = arith.addi %0, %c2_i32 : i32
    %26 = arith.index_cast %25 : i32 to index
    %27 = memref.load %arg1[%26] : memref<8xi32, #tpu.memory_space<smem>>
    %c2_i32_11 = arith.constant 2 : i32
    %28 = arith.addi %0, %c2_i32_11 : i32
    %29 = arith.index_cast %28 : i32 to index
    %30 = memref.load %arg2[%29] : memref<8xi32, #tpu.memory_space<smem>>
    %31 = arith.index_cast %27 : i32 to index
    %c0_12 = arith.constant 0 : index
    %32 = vector.load %arg3[%31, %c0_12] : memref<256x32xf32, #tpu.memory_space<vmem>>, vector<1x32xf32>
    %c2 = arith.constant 2 : index
    %c0_13 = arith.constant 0 : index
    %33 = vector.load %arg12[%c2, %c0_13] : memref<8x64xf32, #tpu.memory_space<vmem>>, vector<1x32xf32>
    tpu.vector_store %arg12[%c2, %c0_13], %32 {strides = array<i32>} : memref<8x64xf32, #tpu.memory_space<vmem>>, vector<1x32xf32>,
    %34 = arith.index_cast %30 : i32 to index
    %c0_14 = arith.constant 0 : index
    %35 = vector.load %arg4[%34, %c0_14] : memref<16x32xf32, #tpu.memory_space<vmem>>, vector<1x32xf32>
    %c2_15 = arith.constant 2 : index
    %c32_16 = arith.constant 32 : index
    %36 = vector.load %arg12[%c2_15, %c32_16] : memref<8x64xf32, #tpu.memory_space<vmem>>, vector<1x32xf32>
    tpu.vector_store %arg12[%c2_15, %c32_16], %35 {strides = array<i32>} : memref<8x64xf32, #tpu.memory_space<vmem>>, vector<1x32xf32>,
    %c3_i32 = arith.constant 3 : i32
    %37 = arith.addi %0, %c3_i32 : i32
    %38 = arith.index_cast %37 : i32 to index
    %39 = memref.load %arg1[%38] : memref<8xi32, #tpu.memory_space<smem>>
    %c3_i32_17 = arith.constant 3 : i32
    %40 = arith.addi %0, %c3_i32_17 : i32
    %41 = arith.index_cast %40 : i32 to index
    %42 = memref.load %arg2[%41] : memref<8xi32, #tpu.memory_space<smem>>
    %43 = arith.index_cast %39 : i32 to index
    %c0_18 = arith.constant 0 : index
    %44 = vector.load %arg3[%43, %c0_18] : memref<256x32xf32, #tpu.memory_space<vmem>>, vector<1x32xf32>
    %c3 = arith.constant 3 : index
    %c0_19 = arith.constant 0 : index
    %45 = vector.load %arg12[%c3, %c0_19] : memref<8x64xf32, #tpu.memory_space<vmem>>, vector<1x32xf32>
    tpu.vector_store %arg12[%c3, %c0_19], %44 {strides = array<i32>} : memref<8x64xf32, #tpu.memory_space<vmem>>, vector<1x32xf32>,
    %46 = arith.index_cast %42 : i32 to index
    %c0_20 = arith.constant 0 : index
    %47 = vector.load %arg4[%46, %c0_20] : memref<16x32xf32, #tpu.memory_space<vmem>>, vector<1x32xf32>
    %c3_21 = arith.constant 3 : index
    %c32_22 = arith.constant 32 : index
    %48 = vector.load %arg12[%c3_21, %c32_22] : memref<8x64xf32, #tpu.memory_space<vmem>>, vector<1x32xf32>
    tpu.vector_store %arg12[%c3_21, %c32_22], %47 {strides = array<i32>} : memref<8x64xf32, #tpu.memory_space<vmem>>, vector<1x32xf32>,
    %c4_i32 = arith.constant 4 : i32
    %49 = arith.addi %0, %c4_i32 : i32
    %50 = arith.index_cast %49 : i32 to index
    %51 = memref.load %arg1[%50] : memref<8xi32, #tpu.memory_space<smem>>
    %c4_i32_23 = arith.constant 4 : i32
    %52 = arith.addi %0, %c4_i32_23 : i32
    %53 = arith.index_cast %52 : i32 to index
    %54 = memref.load %arg2[%53] : memref<8xi32, #tpu.memory_space<smem>>
    %55 = arith.index_cast %51 : i32 to index
    %c0_24 = arith.constant 0 : index
    %56 = vector.load %arg3[%55, %c0_24] : memref<256x32xf32, #tpu.memory_space<vmem>>, vector<1x32xf32>
    %c4 = arith.constant 4 : index
    %c0_25 = arith.constant 0 : index
    %57 = vector.load %arg12[%c4, %c0_25] : memref<8x64xf32, #tpu.memory_space<vmem>>, vector<1x32xf32>
    tpu.vector_store %arg12[%c4, %c0_25], %56 {strides = array<i32>} : memref<8x64xf32, #tpu.memory_space<vmem>>, vector<1x32xf32>,
    %58 = arith.index_cast %54 : i32 to index
    %c0_26 = arith.constant 0 : index
    %59 = vector.load %arg4[%58, %c0_26] : memref<16x32xf32, #tpu.memory_space<vmem>>, vector<1x32xf32>
    %c4_27 = arith.constant 4 : index
    %c32_28 = arith.constant 32 : index
    %60 = vector.load %arg12[%c4_27, %c32_28] : memref<8x64xf32, #tpu.memory_space<vmem>>, vector<1x32xf32>
    tpu.vector_store %arg12[%c4_27, %c32_28], %59 {strides = array<i32>} : memref<8x64xf32, #tpu.memory_space<vmem>>, vector<1x32xf32>,
    %c5_i32 = arith.constant 5 : i32
    %61 = arith.addi %0, %c5_i32 : i32
    %62 = arith.index_cast %61 : i32 to index
    %63 = memref.load %arg1[%62] : memref<8xi32, #tpu.memory_space<smem>>
    %c5_i32_29 = arith.constant 5 : i32
    %64 = arith.addi %0, %c5_i32_29 : i32
    %65 = arith.index_cast %64 : i32 to index
    %66 = memref.load %arg2[%65] : memref<8xi32, #tpu.memory_space<smem>>
    %67 = arith.index_cast %63 : i32 to index
    %c0_30 = arith.constant 0 : index
    %68 = vector.load %arg3[%67, %c0_30] : memref<256x32xf32, #tpu.memory_space<vmem>>, vector<1x32xf32>
    %c5 = arith.constant 5 : index
    %c0_31 = arith.constant 0 : index
    %69 = vector.load %arg12[%c5, %c0_31] : memref<8x64xf32, #tpu.memory_space<vmem>>, vector<1x32xf32>
    tpu.vector_store %arg12[%c5, %c0_31], %68 {strides = array<i32>} : memref<8x64xf32, #tpu.memory_space<vmem>>, vector<1x32xf32>,
    %70 = arith.index_cast %66 : i32 to index
    %c0_32 = arith.constant 0 : index
    %71 = vector.load %arg4[%70, %c0_32] : memref<16x32xf32, #tpu.memory_space<vmem>>, vector<1x32xf32>
    %c5_33 = arith.constant 5 : index
    %c32_34 = arith.constant 32 : index
    %72 = vector.load %arg12[%c5_33, %c32_34] : memref<8x64xf32, #tpu.memory_space<vmem>>, vector<1x32xf32>
    tpu.vector_store %arg12[%c5_33, %c32_34], %71 {strides = array<i32>} : memref<8x64xf32, #tpu.memory_space<vmem>>, vector<1x32xf32>,
    %c6_i32 = arith.constant 6 : i32
    %73 = arith.addi %0, %c6_i32 : i32
    %74 = arith.index_cast %73 : i32 to index
    %75 = memref.load %arg1[%74] : memref<8xi32, #tpu.memory_space<smem>>
    %c6_i32_35 = arith.constant 6 : i32
    %76 = arith.addi %0, %c6_i32_35 : i32
    %77 = arith.index_cast %76 : i32 to index
    %78 = memref.load %arg2[%77] : memref<8xi32, #tpu.memory_space<smem>>
    %79 = arith.index_cast %75 : i32 to index
    %c0_36 = arith.constant 0 : index
    %80 = vector.load %arg3[%79, %c0_36] : memref<256x32xf32, #tpu.memory_space<vmem>>, vector<1x32xf32>
    %c6 = arith.constant 6 : index
    %c0_37 = arith.constant 0 : index
    %81 = vector.load %arg12[%c6, %c0_37] : memref<8x64xf32, #tpu.memory_space<vmem>>, vector<1x32xf32>
    tpu.vector_store %arg12[%c6, %c0_37], %80 {strides = array<i32>} : memref<8x64xf32, #tpu.memory_space<vmem>>, vector<1x32xf32>,
    %82 = arith.index_cast %78 : i32 to index
    %c0_38 = arith.constant 0 : index
    %83 = vector.load %arg4[%82, %c0_38] : memref<16x32xf32, #tpu.memory_space<vmem>>, vector<1x32xf32>
    %c6_39 = arith.constant 6 : index
    %c32_40 = arith.constant 32 : index
    %84 = vector.load %arg12[%c6_39, %c32_40] : memref<8x64xf32, #tpu.memory_space<vmem>>, vector<1x32xf32>
    tpu.vector_store %arg12[%c6_39, %c32_40], %83 {strides = array<i32>} : memref<8x64xf32, #tpu.memory_space<vmem>>, vector<1x32xf32>,
    %c7_i32 = arith.constant 7 : i32
    %85 = arith.addi %0, %c7_i32 : i32
    %86 = arith.index_cast %85 : i32 to index
    %87 = memref.load %arg1[%86] : memref<8xi32, #tpu.memory_space<smem>>
    %c7_i32_41 = arith.constant 7 : i32
    %88 = arith.addi %0, %c7_i32_41 : i32
    %89 = arith.index_cast %88 : i32 to index
    %90 = memref.load %arg2[%89] : memref<8xi32, #tpu.memory_space<smem>>
    %91 = arith.index_cast %87 : i32 to index
    %c0_42 = arith.constant 0 : index
    %92 = vector.load %arg3[%91, %c0_42] : memref<256x32xf32, #tpu.memory_space<vmem>>, vector<1x32xf32>
    %c7 = arith.constant 7 : index
    %c0_43 = arith.constant 0 : index
    %93 = vector.load %arg12[%c7, %c0_43] : memref<8x64xf32, #tpu.memory_space<vmem>>, vector<1x32xf32>
    tpu.vector_store %arg12[%c7, %c0_43], %92 {strides = array<i32>} : memref<8x64xf32, #tpu.memory_space<vmem>>, vector<1x32xf32>,
    %94 = arith.index_cast %90 : i32 to index
    %c0_44 = arith.constant 0 : index
    %95 = vector.load %arg4[%94, %c0_44] : memref<16x32xf32, #tpu.memory_space<vmem>>, vector<1x32xf32>
    %c7_45 = arith.constant 7 : index
    %c32_46 = arith.constant 32 : index
    %96 = vector.load %arg12[%c7_45, %c32_46] : memref<8x64xf32, #tpu.memory_space<vmem>>, vector<1x32xf32>
    tpu.vector_store %arg12[%c7_45, %c32_46], %95 {strides = array<i32>} : memref<8x64xf32, #tpu.memory_space<vmem>>, vector<1x32xf32>,
    %c0_47 = arith.constant 0 : index
    %c0_48 = arith.constant 0 : index
    %97 = vector.load %arg12[%c0_47, %c0_48] : memref<8x64xf32, #tpu.memory_space<vmem>>, vector<8x64xf32>
    %c0_49 = arith.constant 0 : index
    %c0_50 = arith.constant 0 : index
    %98 = vector.load %arg5[%c0_49, %c0_50] : memref<64x1152xf32, #tpu.memory_space<vmem>>, vector<64x1152xf32>
    %cst = arith.constant dense<0.000000e+00> : vector<8x1152xf32>
    %99 = tpu.matmul %97, %98, %cst {dimension_numbers = #tpu.dot_dimension_numbers<[1], [0], [0], [1], [0, 0, 1, 1], [], []>} : vector<8x64xf32>, vector<64x1152xf32>, vector<8x1152xf32> -> vector<8x1152xf32>
    %c0_51 = arith.constant 0 : index
    %c0_52 = arith.constant 0 : index
    %100 = vector.load %arg6[%c0_51, %c0_52] : memref<1x1152xf32, #tpu.memory_space<vmem>>, vector<1x1152xf32>
    %101 = vector.broadcast %100 : vector<1x1152xf32> to vector<8x1152xf32>
    %102 = arith.addf %99, %101 : vector<8x1152xf32>
    %cst_53 = arith.constant 0.000000e+00 : f32
    %103 = vector.broadcast %cst_53 : f32 to vector<8x1152xf32>
    %104 = arith.maximumf %102, %103 : vector<8x1152xf32>
    %c0_54 = arith.constant 0 : index
    %c0_55 = arith.constant 0 : index
    %105 = vector.load %arg7[%c0_54, %c0_55] : memref<1152x32xf32, #tpu.memory_space<vmem>>, vector<1152x32xf32>
    %cst_56 = arith.constant dense<0.000000e+00> : vector<8x32xf32>
    %106 = tpu.matmul %104, %105, %cst_56 {dimension_numbers = #tpu.dot_dimension_numbers<[1], [0], [0], [1], [0, 0, 1, 1], [], []>} : vector<8x1152xf32>, vector<1152x32xf32>, vector<8x32xf32> -> vector<8x32xf32>
    %c0_57 = arith.constant 0 : index
    %c0_58 = arith.constant 0 : index
    %107 = vector.load %arg8[%c0_57, %c0_58] : memref<1x32xf32, #tpu.memory_space<vmem>>, vector<1x32xf32>
    %108 = vector.broadcast %107 : vector<1x32xf32> to vector<8x32xf32>
    %109 = arith.addf %106, %108 : vector<8x32xf32>
    %cst_59 = arith.constant 0.000000e+00 : f32
    %110 = vector.broadcast %cst_59 : f32 to vector<8x32xf32>
    %111 = arith.maximumf %109, %110 : vector<8x32xf32>
    %c0_60 = arith.constant 0 : index
    %c0_61 = arith.constant 0 : index
    %112 = vector.load %arg9[%c0_60, %c0_61] : memref<32x256xf32, #tpu.memory_space<vmem>>, vector<32x256xf32>
    %cst_62 = arith.constant dense<0.000000e+00> : vector<8x256xf32>
    %113 = tpu.matmul %111, %112, %cst_62 {dimension_numbers = #tpu.dot_dimension_numbers<[1], [0], [0], [1], [0, 0, 1, 1], [], []>} : vector<8x32xf32>, vector<32x256xf32>, vector<8x256xf32> -> vector<8x256xf32>
    %c0_63 = arith.constant 0 : index
    %c0_64 = arith.constant 0 : index
    %114 = vector.load %arg10[%c0_63, %c0_64] : memref<1x256xf32, #tpu.memory_space<vmem>>, vector<1x256xf32>
    %115 = vector.broadcast %114 : vector<1x256xf32> to vector<8x256xf32>
    %116 = arith.addf %113, %115 : vector<8x256xf32>
    %117 = arith.negf %116 : vector<8x256xf32>
    %118 = math.exp %117 : vector<8x256xf32>
    %cst_65 = arith.constant 1.000000e+00 : f32
    %119 = vector.broadcast %cst_65 : f32 to vector<8x256xf32>
    %120 = arith.addf %119, %118 : vector<8x256xf32>
    %121 = arith.divf %119, %120 : vector<8x256xf32>
    %c0_66 = arith.constant 0 : index
    %c0_67 = arith.constant 0 : index
    %122 = vector.load %arg11[%c0_66, %c0_67] : memref<8x256xf32, #tpu.memory_space<vmem>>, vector<8x256xf32>
    tpu.vector_store %arg11[%c0_66, %c0_67], %121 {strides = array<i32>} : memref<8x256xf32, #tpu.memory_space<vmem>>, vector<8x256xf32>,
    return
  }
  func.func @transform_0(%arg0: i32, %arg1: memref<8xi32, #tpu.memory_space<smem>>, %arg2: memref<8xi32, #tpu.memory_space<smem>>) -> (i32, i32) {
    %c0_i32 = arith.constant 0 : i32
    %c0_i32_0 = arith.constant 0 : i32
    %c0_i32_1 = arith.constant 0 : i32
    return %c0_i32, %c0_i32_0 : i32, i32
  }
  func.func @transform_1(%arg0: i32, %arg1: memref<8xi32, #tpu.memory_space<smem>>, %arg2: memref<8xi32, #tpu.memory_space<smem>>) -> (i32, i32) {
    %c0_i32 = arith.constant 0 : i32
    %c0_i32_0 = arith.constant 0 : i32
    %c0_i32_1 = arith.constant 0 : i32
    return %c0_i32, %c0_i32_0 : i32, i32
  }
  func.func @transform_2(%arg0: i32, %arg1: memref<8xi32, #tpu.memory_space<smem>>, %arg2: memref<8xi32, #tpu.memory_space<smem>>) -> (i32, i32) {
    %c0_i32 = arith.constant 0 : i32
    %c0_i32_0 = arith.constant 0 : i32
    %c0_i32_1 = arith.constant 0 : i32
    return %c0_i32, %c0_i32_0 : i32, i32
  }
  func.func @transform_3(%arg0: i32, %arg1: memref<8xi32, #tpu.memory_space<smem>>, %arg2: memref<8xi32, #tpu.memory_space<smem>>) -> (i32, i32) {
    %c0_i32 = arith.constant 0 : i32
    %c0_i32_0 = arith.constant 0 : i32
    %c0_i32_1 = arith.constant 0 : i32
    return %c0_i32, %c0_i32_0 : i32, i32
  }
  func.func @transform_4(%arg0: i32, %arg1: memref<8xi32, #tpu.memory_space<smem>>, %arg2: memref<8xi32, #tpu.memory_space<smem>>) -> (i32, i32) {
    %c0_i32 = arith.constant 0 : i32
    %c0_i32_0 = arith.constant 0 : i32
    %c0_i32_1 = arith.constant 0 : i32
    return %c0_i32, %c0_i32_0 : i32, i32
  }
  func.func @transform_5(%arg0: i32, %arg1: memref<8xi32, #tpu.memory_space<smem>>, %arg2: memref<8xi32, #tpu.memory_space<smem>>) -> (i32, i32) {
    %c0_i32 = arith.constant 0 : i32
    %c0_i32_0 = arith.constant 0 : i32
    %c0_i32_1 = arith.constant 0 : i32
    return %c0_i32, %c0_i32_0 : i32, i32
  }
  func.func @transform_6(%arg0: i32, %arg1: memref<8xi32, #tpu.memory_space<smem>>, %arg2: memref<8xi32, #tpu.memory_space<smem>>) -> (i32, i32) {
    %c0_i32 = arith.constant 0 : i32
    %c0_i32_0 = arith.constant 0 : i32
    %c0_i32_1 = arith.constant 0 : i32
    return %c0_i32, %c0_i32_0 : i32, i32
  }
  func.func @transform_7(%arg0: i32, %arg1: memref<8xi32, #tpu.memory_space<smem>>, %arg2: memref<8xi32, #tpu.memory_space<smem>>) -> (i32, i32) {
    %c0_i32 = arith.constant 0 : i32
    %c0_i32_0 = arith.constant 0 : i32
    %c0_i32_1 = arith.constant 0 : i32
    return %c0_i32, %c0_i32_0 : i32, i32
  }
  func.func @transform_8(%arg0: i32, %arg1: memref<8xi32, #tpu.memory_space<smem>>, %arg2: memref<8xi32, #tpu.memory_space<smem>>) -> (i32, i32) {
    %c0_i32 = arith.constant 0 : i32
    %c0_i32_0 = arith.constant 0 : i32
    return %arg0, %c0_i32 : i32, i32
  }
}

</mosaic_0001>

<llo_original>
// kernel: tpu_custom_call.1
$region0: #{tpu_custom_call.1}
  #allocation0 [shape = 'u32[]', space=smem, size = 0x4, offset = 0x4, fixed_abs, tag = 'smem constant byte address 0x4 - core index']
  #allocation1 [shape = 'u32[72,128]{1,0:T(1,128)}', space=vmem, size = 0x9000, scoped, tag = 'internal scratch']
  #allocation2 [shape = 'f32[8,64]{1,0:T(8,128)}', space=vmem, size = 0x1000, scoped, tag = 'scratch operand']
  #allocation3 [shape = 's32[1]{0}', space=sflag, size = 0x4, scoped, tag = 'scoped memory for tpu_custom_call.1']
  #allocation4 [shape = 'u8[512]{0}', space=smem, size = 0x200, scoped, tag = 'prefetched SMEM operand 0']
  #allocation5 [shape = 'u8[512]{0}', space=smem, size = 0x200, scoped, tag = 'prefetched SMEM operand 1']
  %s0 = inlined_call_operand.vmem [shape: s32[8], index: 0, kind: input, shape index: {}]
  %s1 = inlined_call_operand.vmem [shape: s32[8], index: 1, kind: input, shape index: {}]
  %s2 = inlined_call_operand.vmem [shape: f32[256,32], index: 2, kind: input, shape index: {}]
  %s3 = inlined_call_operand.vmem [shape: f32[16,32], index: 3, kind: input, shape index: {}]
  %s4 = inlined_call_operand.vmem [shape: f32[64,1152], index: 4, kind: input, shape index: {}]
  %s5 = inlined_call_operand.vmem [shape: f32[1,1152], index: 5, kind: input, shape index: {}]
  %s6 = inlined_call_operand.vmem [shape: f32[1152,32], index: 6, kind: input, shape index: {}]
  %s7 = inlined_call_operand.vmem [shape: f32[1,32], index: 7, kind: input, shape index: {}]
  %s8 = inlined_call_operand.vmem [shape: f32[32,256], index: 8, kind: input, shape index: {}]
  %s9 = inlined_call_operand.vmem [shape: f32[1,256], index: 9, kind: input, shape index: {}]
  %s10 = inlined_call_operand.hbm [shape: f32[8,256], index: 10, kind: output, shape index: {}]
  %s11 = sld [smem:[#allocation0]]
  $region42: #{tpu_custom_call.1} parent=0
    _
  %s13 = ssub.s32 1, %s11
  %s14 = scalar_select 0, %s13, %s11
  %s16 = sshll.u32 %s0, 4
  %s17 = int_to_ptr.vmem [resolvable:$true] %s16
  %19 = dma.vmem_to_smem %s17, 16, [#allocation4], [#allocation3]
  %s21 = sshll.u32 %s1, 4
  %s22 = int_to_ptr.vmem [resolvable:$true] %s21
  %24 = dma.vmem_to_smem %s22, 16, [#allocation5], [#allocation3]
  %26 = dma.done [#allocation3], 32
  %27 = sfence
  $region1: #{tpu_custom_call.1} parent=0
    #allocation6 [shape = 'u8[8192]{0}', space=vmem, size = 0x2000, scoped, tag = 'output window, operand 0, single buffered']
    #allocation7 [shape = 's32[1]{0}', space=sflag, size = 0x4, scoped, tag = 'scoped memory for tpu_custom_call.1']
    %28 = vsyncpa [#allocation7], 0
    // Predicated region
    $region2: #{tpu_custom_call.1} parent=1 // pred_check
      _
    $region3: #{tpu_custom_call.1} parent=1 // pred_check_branch
      %30 = sbr.rel (0) target = $region5
    $region4: #{tpu_custom_call.1} parent=1 // pred_region
      _
    $region5: #{tpu_custom_call.1} parent=1 // pred_fallthru
      _
    // Predicated region
    $region6: #{tpu_custom_call.1} parent=1 // pred_check
      _
    $region7: #{tpu_custom_call.1} parent=1 // pred_check_branch
      %32 = sbr.rel (0) target = $region9
    $region8: #{tpu_custom_call.1} parent=1 // pred_region
      _
    $region9: #{tpu_custom_call.1} parent=1 // pred_fallthru
      _
    // Predicated region
    $region10: #{tpu_custom_call.1} parent=1 // pred_check
      _
    $region11: #{tpu_custom_call.1} parent=1 // pred_check_branch
      %34 = sbr.rel (0) target = $region13
    $region12: #{tpu_custom_call.1} parent=1 // pred_region
      _
    $region13: #{tpu_custom_call.1} parent=1 // pred_fallthru
      _
    // Predicated region
    $region14: #{tpu_custom_call.1} parent=1 // pred_check
      _
    $region15: #{tpu_custom_call.1} parent=1 // pred_check_branch
      %36 = sbr.rel (0) target = $region17
    $region16: #{tpu_custom_call.1} parent=1 // pred_region
      _
    $region17: #{tpu_custom_call.1} parent=1 // pred_fallthru
      _
    // Predicated region
    $region18: #{tpu_custom_call.1} parent=1 // pred_check
      _
    $region19: #{tpu_custom_call.1} parent=1 // pred_check_branch
      %38 = sbr.rel (0) target = $region21
    $region20: #{tpu_custom_call.1} parent=1 // pred_region
      _
    $region21: #{tpu_custom_call.1} parent=1 // pred_fallthru
      _
    // Predicated region
    $region22: #{tpu_custom_call.1} parent=1 // pred_check
      _
    $region23: #{tpu_custom_call.1} parent=1 // pred_check_branch
      %40 = sbr.rel (0) target = $region25
    $region24: #{tpu_custom_call.1} parent=1 // pred_region
      _
    $region25: #{tpu_custom_call.1} parent=1 // pred_fallthru
      _
    // Predicated region
    $region26: #{tpu_custom_call.1} parent=1 // pred_check
      _
    $region27: #{tpu_custom_call.1} parent=1 // pred_check_branch
      %42 = sbr.rel (0) target = $region29
    $region28: #{tpu_custom_call.1} parent=1 // pred_region
      _
    $region29: #{tpu_custom_call.1} parent=1 // pred_fallthru
      _
    // Predicated region
    $region30: #{tpu_custom_call.1} parent=1 // pred_check
      _
    $region31: #{tpu_custom_call.1} parent=1 // pred_check_branch
      %44 = sbr.rel (0) target = $region33
    $region32: #{tpu_custom_call.1} parent=1 // pred_region
      _
    $region33: #{tpu_custom_call.1} parent=1 // pred_fallthru
      _
    %s45 = smul.u32 0, 8
    %s46 = sld [smem:[#allocation4 + %s45]]
    %s47 = sld [smem:[#allocation5 + %s45]]
    %s48 = scalar_lea.vmem %s2, %s46
    %v49 = vld [vmem:[%s48] sm:$0x1]
    %vm50 = vcmask 253952
    %51 = vst.msk [vmem:[#allocation2] sm:$0x1] %vm50, %v49
    %s52 = scalar_lea.vmem %s3, %s47
    %v53 = vld [vmem:[%s52] sm:$0x1]
    %55 = vrot.lane.b32.xlu0 %v53, 32
    %v56 = vpop.permute.xlu0 %55
    %vm58 = vcmask 516352
    %59 = vst.msk [vmem:[#allocation2] sm:$0x1] %vm58, %v56
    %s60 = sadd.s32 %s45, 1
    %s61 = sld [smem:[#allocation4 + %s60]]
    %s62 = sld [smem:[#allocation5 + %s60]]
    %s63 = scalar_lea.vmem %s2, %s61
    %v64 = vld [vmem:[%s63] sm:$0x1]
    %65 = vst.msk [vmem:[#allocation2 + $0x1] sm:$0x1] %vm50, %v64
    %s66 = scalar_lea.vmem %s3, %s62
    %v67 = vld [vmem:[%s66] sm:$0x1]
    %69 = vrot.lane.b32.xlu0 %v67, 32
    %v70 = vpop.permute.xlu0 %69
    %72 = vst.msk [vmem:[#allocation2 + $0x1] sm:$0x1] %vm58, %v70
    %s73 = sadd.s32 %s45, 2
    %s74 = sld [smem:[#allocation4 + %s73]]
    %s75 = sld [smem:[#allocation5 + %s73]]
    %s76 = scalar_lea.vmem %s2, %s74
    %v77 = vld [vmem:[%s76] sm:$0x1]
    %78 = vst.msk [vmem:[#allocation2 + $0x2] sm:$0x1] %vm50, %v77
    %s79 = scalar_lea.vmem %s3, %s75
    %v80 = vld [vmem:[%s79] sm:$0x1]
    %82 = vrot.lane.b32.xlu0 %v80, 32
    %v83 = vpop.permute.xlu0 %82
    %85 = vst.msk [vmem:[#allocation2 + $0x2] sm:$0x1] %vm58, %v83
    %s86 = sadd.s32 %s45, 3
    %s87 = sld [smem:[#allocation4 + %s86]]
    %s88 = sld [smem:[#allocation5 + %s86]]
    %s89 = scalar_lea.vmem %s2, %s87
    %v90 = vld [vmem:[%s89] sm:$0x1]
    %91 = vst.msk [vmem:[#allocation2 + $0x3] sm:$0x1] %vm50, %v90
    %s92 = scalar_lea.vmem %s3, %s88
    %v93 = vld [vmem:[%s92] sm:$0x1]
    %95 = vrot.lane.b32.xlu0 %v93, 32
    %v96 = vpop.permute.xlu0 %95
    %98 = vst.msk [vmem:[#allocation2 + $0x3] sm:$0x1] %vm58, %v96
    %s99 = sadd.s32 %s45, 4
    %s100 = sld [smem:[#allocation4 + %s99]]
    %s101 = sld [smem:[#allocation5 + %s99]]
    %s102 = scalar_lea.vmem %s2, %s100
    %v103 = vld [vmem:[%s102] sm:$0x1]
    %104 = vst.msk [vmem:[#allocation2 + $0x4] sm:$0x1] %vm50, %v103
    %s105 = scalar_lea.vmem %s3, %s101
    %v106 = vld [vmem:[%s105] sm:$0x1]
    %108 = vrot.lane.b32.xlu0 %v106, 32
    %v109 = vpop.permute.xlu0 %108
    %111 = vst.msk [vmem:[#allocation2 + $0x4] sm:$0x1] %vm58, %v109
    %s112 = sadd.s32 %s45, 5
    %s113 = sld [smem:[#allocation4 + %s112]]
    %s114 = sld [smem:[#allocation5 + %s112]]
    %s115 = scalar_lea.vmem %s2, %s113
    %v116 = vld [vmem:[%s115] sm:$0x1]
    %117 = vst.msk [vmem:[#allocation2 + $0x5] sm:$0x1] %vm50, %v116
    %s118 = scalar_lea.vmem %s3, %s114
    %v119 = vld [vmem:[%s118] sm:$0x1]
    %121 = vrot.lane.b32.xlu0 %v119, 32
    %v122 = vpop.permute.xlu0 %121
    %124 = vst.msk [vmem:[#allocation2 + $0x5] sm:$0x1] %vm58, %v122
    %s125 = sadd.s32 %s45, 6
    %s126 = sld [smem:[#allocation4 + %s125]]
    %s127 = sld [smem:[#allocation5 + %s125]]
    %s128 = scalar_lea.vmem %s2, %s126
    %v129 = vld [vmem:[%s128] sm:$0x1]
    %130 = vst.msk [vmem:[#allocation2 + $0x6] sm:$0x1] %vm50, %v129
    %s131 = scalar_lea.vmem %s3, %s127
    %v132 = vld [vmem:[%s131] sm:$0x1]
    %134 = vrot.lane.b32.xlu0 %v132, 32
    %v135 = vpop.permute.xlu0 %134
    %137 = vst.msk [vmem:[#allocation2 + $0x6] sm:$0x1] %vm58, %v135
    %s138 = sadd.s32 %s45, 7
    %s139 = sld [smem:[#allocation4 + %s138]]
    %s140 = sld [smem:[#allocation5 + %s138]]
    %s141 = scalar_lea.vmem %s2, %s139
    %v142 = vld [vmem:[%s141] sm:$0x1]
    %143 = vst.msk [vmem:[#allocation2 + $0x7] sm:$0x1] %vm50, %v142
    %s144 = scalar_lea.vmem %s3, %s140
    %v145 = vld [vmem:[%s144] sm:$0x1]
    %147 = vrot.lane.b32.xlu0 %v145, 32
    %v148 = vpop.permute.xlu0 %147
    %150 = vst.msk [vmem:[#allocation2 + $0x7] sm:$0x1] %vm58, %v148
    %v151 = vld [vmem:[#allocation2] sm:$0xff]
    %v152 = vld [vmem:[%s4] sm:$0xff]
    %v153 = vld [vmem:[%s4 + $0x8] sm:$0xff]
    %v154 = vld [vmem:[%s4 + $0x10] sm:$0xff]
    %v155 = vld [vmem:[%s4 + $0x18] sm:$0xff]
    %v156 = vld [vmem:[%s4 + $0x20] sm:$0xff]
    %v157 = vld [vmem:[%s4 + $0x28] sm:$0xff]
    %v158 = vld [vmem:[%s4 + $0x30] sm:$0xff]
    %v159 = vld [vmem:[%s4 + $0x38] sm:$0xff]
    %v160 = vld [vmem:[%s4 + $0x40] sm:$0xff]
    %v161 = vld [vmem:[%s4 + $0x48] sm:$0xff]
    %v162 = vld [vmem:[%s4 + $0x50] sm:$0xff]
    %v163 = vld [vmem:[%s4 + $0x58] sm:$0xff]
    %v164 = vld [vmem:[%s4 + $0x60] sm:$0xff]
    %v165 = vld [vmem:[%s4 + $0x68] sm:$0xff]
    %v166 = vld [vmem:[%s4 + $0x70] sm:$0xff]
    %v167 = vld [vmem:[%s4 + $0x78] sm:$0xff]
    %v168 = vld [vmem:[%s4 + $0x80] sm:$0xff]
    %v169 = vld [vmem:[%s4 + $0x88] sm:$0xff]
    %v170 = vld [vmem:[%s4 + $0x90] sm:$0xff]
    %v171 = vld [vmem:[%s4 + $0x98] sm:$0xff]
    %v172 = vld [vmem:[%s4 + $0xa0] sm:$0xff]
    %v173 = vld [vmem:[%s4 + $0xa8] sm:$0xff]
    %v174 = vld [vmem:[%s4 + $0xb0] sm:$0xff]
    %v175 = vld [vmem:[%s4 + $0xb8] sm:$0xff]
    %v176 = vld [vmem:[%s4 + $0xc0] sm:$0xff]
    %v177 = vld [vmem:[%s4 + $0xc8] sm:$0xff]
    %v178 = vld [vmem:[%s4 + $0xd0] sm:$0xff]
    %v179 = vld [vmem:[%s4 + $0xd8] sm:$0xff]
    %v180 = vld [vmem:[%s4 + $0xe0] sm:$0xff]
    %v181 = vld [vmem:[%s4 + $0xe8] sm:$0xff]
    %v182 = vld [vmem:[%s4 + $0xf0] sm:$0xff]
    %v183 = vld [vmem:[%s4 + $0xf8] sm:$0xff]
    %v184 = vld [vmem:[%s4 + $0x100] sm:$0xff]
    %v185 = vld [vmem:[%s4 + $0x108] sm:$0xff]
    %v186 = vld [vmem:[%s4 + $0x110] sm:$0xff]
    %v187 = vld [vmem:[%s4 + $0x118] sm:$0xff]
    %v188 = vld [vmem:[%s4 + $0x120] sm:$0xff]
    %v189 = vld [vmem:[%s4 + $0x128] sm:$0xff]
    %v190 = vld [vmem:[%s4 + $0x130] sm:$0xff]
    %v191 = vld [vmem:[%s4 + $0x138] sm:$0xff]
    %v192 = vld [vmem:[%s4 + $0x140] sm:$0xff]
    %v193 = vld [vmem:[%s4 + $0x148] sm:$0xff]
    %v194 = vld [vmem:[%s4 + $0x150] sm:$0xff]
    %v195 = vld [vmem:[%s4 + $0x158] sm:$0xff]
    %v196 = vld [vmem:[%s4 + $0x160] sm:$0xff]
    %v197 = vld [vmem:[%s4 + $0x168] sm:$0xff]
    %v198 = vld [vmem:[%s4 + $0x170] sm:$0xff]
    %v199 = vld [vmem:[%s4 + $0x178] sm:$0xff]
    %v200 = vld [vmem:[%s4 + $0x180] sm:$0xff]
    %v201 = vld [vmem:[%s4 + $0x188] sm:$0xff]
    %v202 = vld [vmem:[%s4 + $0x190] sm:$0xff]
    %v203 = vld [vmem:[%s4 + $0x198] sm:$0xff]
    %v204 = vld [vmem:[%s4 + $0x1a0] sm:$0xff]
    %v205 = vld [vmem:[%s4 + $0x1a8] sm:$0xff]
    %v206 = vld [vmem:[%s4 + $0x1b0] sm:$0xff]
    %v207 = vld [vmem:[%s4 + $0x1b8] sm:$0xff]
    %v208 = vld [vmem:[%s4 + $0x1c0] sm:$0xff]
    %v209 = vld [vmem:[%s4 + $0x1c8] sm:$0xff]
    %v210 = vld [vmem:[%s4 + $0x1d0] sm:$0xff]
    %v211 = vld [vmem:[%s4 + $0x1d8] sm:$0xff]
    %v212 = vld [vmem:[%s4 + $0x1e0] sm:$0xff]
    %v213 = vld [vmem:[%s4 + $0x1e8] sm:$0xff]
    %v214 = vld [vmem:[%s4 + $0x1f0] sm:$0xff]
    %v215 = vld [vmem:[%s4 + $0x1f8] sm:$0xff]
    %v216 = vld [vmem:[%s4 + $0x200] sm:$0xff]
    %v217 = vld [vmem:[%s4 + $0x208] sm:$0xff]
    %v218 = vld [vmem:[%s4 + $0x210] sm:$0xff]
    %v219 = vld [vmem:[%s4 + $0x218] sm:$0xff]
    %v220 = vld [vmem:[%s4 + $0x220] sm:$0xff]
    %v221 = vld [vmem:[%s4 + $0x228] sm:$0xff]
    %v222 = vld [vmem:[%s4 + $0x230] sm:$0xff]
    %v223 = vld [vmem:[%s4 + $0x238] sm:$0xff]
    %v224 = vld [vmem:[%s5] sm:$0xff]
    %v225 = vld [vmem:[%s5 + $0x8] sm:$0x1]
    %v228 = vperm.slane %v224, 0
    %v229 = vperm.slane %v224, 1
    %v230 = vperm.slane %v224, 2
    %v231 = vperm.slane %v224, 3
    %v232 = vperm.slane %v224, 4
    %v233 = vperm.slane %v224, 5
    %v234 = vperm.slane %v224, 6
    %v235 = vperm.slane %v224, 7
    %v236 = vperm.slane %v225, 0
    %vm246 = vcmask 523264
    %v248 = vsel %vm246, %v151, 0
    %250 = vmatpush.msra.mxu0 0.0
    %251 = vmatpush.msra.mxu0 0.0
    %252 = vmatpush.msra.mxu0 0.0
    %253 = vmatpush.msra.mxu0 0.0
    %254 = vmatpush.msra.mxu0 0.0
    %255 = vmatpush.msra.mxu0 0.0
    %256 = vmatpush.msra.mxu0 0.0
    %257 = vmatpush.msra.mxu0 0.0
    %258 = vmatpush.msra.mxu0 %v215
    %259 = vmatpush.msra.mxu0 %v206
    %260 = vmatpush.msra.mxu0 %v197
    %261 = vmatpush.msra.mxu0 %v188
    %262 = vmatpush.msra.mxu0 %v179
    %263 = vmatpush.msra.mxu0 %v170
    %264 = vmatpush.msra.mxu0 %v161
    %265 = vmatpush.msra.mxu0 %v152
    %266 = vmatmul.f32.gmra.mxu0 %v248
    %v267 = vpop.f32.mrf.mxu0
    %v268 = vadd.f32 %v228, %v267
    %269 = vdwg.mxu0
    %270 = vmatpush.msra.mxu0 0.0
    %271 = vmatpush.msra.mxu0 0.0
    %272 = vmatpush.msra.mxu0 0.0
    %273 = vmatpush.msra.mxu0 0.0
    %274 = vmatpush.msra.mxu0 0.0
    %275 = vmatpush.msra.mxu0 0.0
    %276 = vmatpush.msra.mxu0 0.0
    %277 = vmatpush.msra.mxu0 0.0
    %278 = vmatpush.msra.mxu0 %v216
    %279 = vmatpush.msra.mxu0 %v207
    %280 = vmatpush.msra.mxu0 %v198
    %281 = vmatpush.msra.mxu0 %v189
    %282 = vmatpush.msra.mxu0 %v180
    %283 = vmatpush.msra.mxu0 %v171
    %284 = vmatpush.msra.mxu0 %v162
    %285 = vmatpush.msra.mxu0 %v153
    %286 = vmatmul.f32.gmra.mxu0 %v248
    %v287 = vpop.f32.mrf.mxu0
    %v288 = vadd.f32 %v229, %v287
    %289 = vdwg.mxu0
    %290 = vmatpush.msra.mxu0 0.0
    %291 = vmatpush.msra.mxu0 0.0
    %292 = vmatpush.msra.mxu0 0.0
    %293 = vmatpush.msra.mxu0 0.0
    %294 = vmatpush.msra.mxu0 0.0
    %295 = vmatpush.msra.mxu0 0.0
    %296 = vmatpush.msra.mxu0 0.0
    %297 = vmatpush.msra.mxu0 0.0
    %298 = vmatpush.msra.mxu0 %v217
    %299 = vmatpush.msra.mxu0 %v208
    %300 = vmatpush.msra.mxu0 %v199
    %301 = vmatpush.msra.mxu0 %v190
    %302 = vmatpush.msra.mxu0 %v181
    %303 = vmatpush.msra.mxu0 %v172
    %304 = vmatpush.msra.mxu0 %v163
    %305 = vmatpush.msra.mxu0 %v154
    %306 = vmatmul.f32.gmra.mxu0 %v248
    %v307 = vpop.f32.mrf.mxu0
    %v308 = vadd.f32 %v230, %v307
    %309 = vdwg.mxu0
    %310 = vmatpush.msra.mxu0 0.0
    %311 = vmatpush.msra.mxu0 0.0
    %312 = vmatpush.msra.mxu0 0.0
    %313 = vmatpush.msra.mxu0 0.0
    %314 = vmatpush.msra.mxu0 0.0
    %315 = vmatpush.msra.mxu0 0.0
    %316 = vmatpush.msra.mxu0 0.0
    %317 = vmatpush.msra.mxu0 0.0
    %318 = vmatpush.msra.mxu0 %v218
    %319 = vmatpush.msra.mxu0 %v209
    %320 = vmatpush.msra.mxu0 %v200
    %321 = vmatpush.msra.mxu0 %v191
    %322 = vmatpush.msra.mxu0 %v182
    %323 = vmatpush.msra.mxu0 %v173
    %324 = vmatpush.msra.mxu0 %v164
    %325 = vmatpush.msra.mxu0 %v155
    %326 = vmatmul.f32.gmra.mxu0 %v248
    %v327 = vpop.f32.mrf.mxu0
    %v328 = vadd.f32 %v231, %v327
    %329 = vdwg.mxu0
    %330 = vmatpush.msra.mxu0 0.0
    %331 = vmatpush.msra.mxu0 0.0
    %332 = vmatpush.msra.mxu0 0.0
    %333 = vmatpush.msra.mxu0 0.0
    %334 = vmatpush.msra.mxu0 0.0
    %335 = vmatpush.msra.mxu0 0.0
    %336 = vmatpush.msra.mxu0 0.0
    %337 = vmatpush.msra.mxu0 0.0
    %338 = vmatpush.msra.mxu0 %v219
    %339 = vmatpush.msra.mxu0 %v210
    %340 = vmatpush.msra.mxu0 %v201
    %341 = vmatpush.msra.mxu0 %v192
    %342 = vmatpush.msra.mxu0 %v183
    %343 = vmatpush.msra.mxu0 %v174
    %344 = vmatpush.msra.mxu0 %v165
    %345 = vmatpush.msra.mxu0 %v156
    %346 = vmatmul.f32.gmra.mxu0 %v248
    %v347 = vpop.f32.mrf.mxu0
    %v348 = vadd.f32 %v232, %v347
    %349 = vdwg.mxu0
    %350 = vmatpush.msra.mxu0 0.0
    %351 = vmatpush.msra.mxu0 0.0
    %352 = vmatpush.msra.mxu0 0.0
    %353 = vmatpush.msra.mxu0 0.0
    %354 = vmatpush.msra.mxu0 0.0
    %355 = vmatpush.msra.mxu0 0.0
    %356 = vmatpush.msra.mxu0 0.0
    %357 = vmatpush.msra.mxu0 0.0
    %358 = vmatpush.msra.mxu0 %v220
    %359 = vmatpush.msra.mxu0 %v211
    %360 = vmatpush.msra.mxu0 %v202
    %361 = vmatpush.msra.mxu0 %v193
    %362 = vmatpush.msra.mxu0 %v184
    %363 = vmatpush.msra.mxu0 %v175
    %364 = vmatpush.msra.mxu0 %v166
    %365 = vmatpush.msra.mxu0 %v157
    %366 = vmatmul.f32.gmra.mxu0 %v248
    %v367 = vpop.f32.mrf.mxu0
    %v368 = vadd.f32 %v233, %v367
    %369 = vdwg.mxu0
    %370 = vmatpush.msra.mxu0 0.0
    %371 = vmatpush.msra.mxu0 0.0
    %372 = vmatpush.msra.mxu0 0.0
    %373 = vmatpush.msra.mxu0 0.0
    %374 = vmatpush.msra.mxu0 0.0
    %375 = vmatpush.msra.mxu0 0.0
    %376 = vmatpush.msra.mxu0 0.0
    %377 = vmatpush.msra.mxu0 0.0
    %378 = vmatpush.msra.mxu0 %v221
    %379 = vmatpush.msra.mxu0 %v212
    %380 = vmatpush.msra.mxu0 %v203
    %381 = vmatpush.msra.mxu0 %v194
    %382 = vmatpush.msra.mxu0 %v185
    %383 = vmatpush.msra.mxu0 %v176
    %384 = vmatpush.msra.mxu0 %v167
    %385 = vmatpush.msra.mxu0 %v158
    %386 = vmatmul.f32.gmra.mxu0 %v248
    %v387 = vpop.f32.mrf.mxu0
    %v388 = vadd.f32 %v234, %v387
    %389 = vdwg.mxu0
    %390 = vmatpush.msra.mxu0 0.0
    %391 = vmatpush.msra.mxu0 0.0
    %392 = vmatpush.msra.mxu0 0.0
    %393 = vmatpush.msra.mxu0 0.0
    %394 = vmatpush.msra.mxu0 0.0
    %395 = vmatpush.msra.mxu0 0.0
    %396 = vmatpush.msra.mxu0 0.0
    %397 = vmatpush.msra.mxu0 0.0
    %398 = vmatpush.msra.mxu0 %v222
    %399 = vmatpush.msra.mxu0 %v213
    %400 = vmatpush.msra.mxu0 %v204
    %401 = vmatpush.msra.mxu0 %v195
    %402 = vmatpush.msra.mxu0 %v186
    %403 = vmatpush.msra.mxu0 %v177
    %404 = vmatpush.msra.mxu0 %v168
    %405 = vmatpush.msra.mxu0 %v159
    %406 = vmatmul.f32.gmra.mxu0 %v248
    %v407 = vpop.f32.mrf.mxu0
    %v408 = vadd.f32 %v235, %v407
    %409 = vdwg.mxu0
    %410 = vmatpush.msra.mxu0 0.0
    %411 = vmatpush.msra.mxu0 0.0
    %412 = vmatpush.msra.mxu0 0.0
    %413 = vmatpush.msra.mxu0 0.0
    %414 = vmatpush.msra.mxu0 0.0
    %415 = vmatpush.msra.mxu0 0.0
    %416 = vmatpush.msra.mxu0 0.0
    %417 = vmatpush.msra.mxu0 0.0
    %418 = vmatpush.msra.mxu0 %v223
    %419 = vmatpush.msra.mxu0 %v214
    %420 = vmatpush.msra.mxu0 %v205
    %421 = vmatpush.msra.mxu0 %v196
    %422 = vmatpush.msra.mxu0 %v187
    %423 = vmatpush.msra.mxu0 %v178
    %424 = vmatpush.msra.mxu0 %v169
    %425 = vmatpush.msra.mxu0 %v160
    %426 = vmatmul.f32.gmra.mxu0 %v248
    %v427 = vpop.f32.mrf.mxu0
    %v428 = vadd.f32 %v236, %v427
    %429 = vdwg.mxu0
    %v430 = vmax.f32 %v268, 0.0
    %v431 = vmax.f32 %v288, 0.0
    %v432 = vmax.f32 %v308, 0.0
    %v433 = vmax.f32 %v328, 0.0
    %v434 = vmax.f32 %v348, 0.0
    %v435 = vmax.f32 %v368, 0.0
    %v436 = vmax.f32 %v388, 0.0
    %v437 = vmax.f32 %v408, 0.0
    %v438 = vmax.f32 %v428, 0.0
    %v439 = vld [vmem:[%s6] sm:$0xff]
    %v440 = vld [vmem:[%s6 + $0x8] sm:$0xff]
    %v441 = vld [vmem:[%s6 + $0x10] sm:$0xff]
    %v442 = vld [vmem:[%s6 + $0x18] sm:$0xff]
    %v443 = vld [vmem:[%s6 + $0x20] sm:$0xff]
    %v444 = vld [vmem:[%s6 + $0x28] sm:$0xff]
    %v445 = vld [vmem:[%s6 + $0x30] sm:$0xff]
    %v446 = vld [vmem:[%s6 + $0x38] sm:$0xff]
    %v447 = vld [vmem:[%s6 + $0x40] sm:$0xff]
    %v448 = vld [vmem:[%s6 + $0x48] sm:$0xff]
    %v449 = vld [vmem:[%s6 + $0x50] sm:$0xff]
    %v450 = vld [vmem:[%s6 + $0x58] sm:$0xff]
    %v451 = vld [vmem:[%s6 + $0x60] sm:$0xff]
    %v452 = vld [vmem:[%s6 + $0x68] sm:$0xff]
    %v453 = vld [vmem:[%s6 + $0x70] sm:$0xff]
    %v454 = vld [vmem:[%s6 + $0x78] sm:$0xff]
    %v455 = vld [vmem:[%s6 + $0x80] sm:$0xff]
    %v456 = vld [vmem:[%s6 + $0x88] sm:$0xff]
    %v457 = vld [vmem:[%s6 + $0x90] sm:$0xff]
    %v458 = vld [vmem:[%s6 + $0x98] sm:$0xff]
    %v459 = vld [vmem:[%s6 + $0xa0] sm:$0xff]
    %v460 = vld [vmem:[%s6 + $0xa8] sm:$0xff]
    %v461 = vld [vmem:[%s6 + $0xb0] sm:$0xff]
    %v462 = vld [vmem:[%s6 + $0xb8] sm:$0xff]
    %v463 = vld [vmem:[%s6 + $0xc0] sm:$0xff]
    %v464 = vld [vmem:[%s6 + $0xc8] sm:$0xff]
    %v465 = vld [vmem:[%s6 + $0xd0] sm:$0xff]
    %v466 = vld [vmem:[%s6 + $0xd8] sm:$0xff]
    %v467 = vld [vmem:[%s6 + $0xe0] sm:$0xff]
    %v468 = vld [vmem:[%s6 + $0xe8] sm:$0xff]
    %v469 = vld [vmem:[%s6 + $0xf0] sm:$0xff]
    %v470 = vld [vmem:[%s6 + $0xf8] sm:$0xff]
    %v471 = vld [vmem:[%s6 + $0x100] sm:$0xff]
    %v472 = vld [vmem:[%s6 + $0x108] sm:$0xff]
    %v473 = vld [vmem:[%s6 + $0x110] sm:$0xff]
    %v474 = vld [vmem:[%s6 + $0x118] sm:$0xff]
    %v475 = vld [vmem:[%s6 + $0x120] sm:$0xff]
    %v476 = vld [vmem:[%s6 + $0x128] sm:$0xff]
    %v477 = vld [vmem:[%s6 + $0x130] sm:$0xff]
    %v478 = vld [vmem:[%s6 + $0x138] sm:$0xff]
    %v479 = vld [vmem:[%s6 + $0x140] sm:$0xff]
    %v480 = vld [vmem:[%s6 + $0x148] sm:$0xff]
    %v481 = vld [vmem:[%s6 + $0x150] sm:$0xff]
    %v482 = vld [vmem:[%s6 + $0x158] sm:$0xff]
    %v483 = vld [vmem:[%s6 + $0x160] sm:$0xff]
    %v484 = vld [vmem:[%s6 + $0x168] sm:$0xff]
    %v485 = vld [vmem:[%s6 + $0x170] sm:$0xff]
    %v486 = vld [vmem:[%s6 + $0x178] sm:$0xff]
    %v487 = vld [vmem:[%s6 + $0x180] sm:$0xff]
    %v488 = vld [vmem:[%s6 + $0x188] sm:$0xff]
    %v489 = vld [vmem:[%s6 + $0x190] sm:$0xff]
    %v490 = vld [vmem:[%s6 + $0x198] sm:$0xff]
    %v491 = vld [vmem:[%s6 + $0x1a0] sm:$0xff]
    %v492 = vld [vmem:[%s6 + $0x1a8] sm:$0xff]
    %v493 = vld [vmem:[%s6 + $0x1b0] sm:$0xff]
    %v494 = vld [vmem:[%s6 + $0x1b8] sm:$0xff]
    %v495 = vld [vmem:[%s6 + $0x1c0] sm:$0xff]
    %v496 = vld [vmem:[%s6 + $0x1c8] sm:$0xff]
    %v497 = vld [vmem:[%s6 + $0x1d0] sm:$0xff]
    %v498 = vld [vmem:[%s6 + $0x1d8] sm:$0xff]
    %v499 = vld [vmem:[%s6 + $0x1e0] sm:$0xff]
    %v500 = vld [vmem:[%s6 + $0x1e8] sm:$0xff]
    %v501 = vld [vmem:[%s6 + $0x1f0] sm:$0xff]
    %v502 = vld [vmem:[%s6 + $0x1f8] sm:$0xff]
    %v503 = vld [vmem:[%s6 + $0x200] sm:$0xff]
    %v504 = vld [vmem:[%s6 + $0x208] sm:$0xff]
    %v505 = vld [vmem:[%s6 + $0x210] sm:$0xff]
    %v506 = vld [vmem:[%s6 + $0x218] sm:$0xff]
    %v507 = vld [vmem:[%s6 + $0x220] sm:$0xff]
    %v508 = vld [vmem:[%s6 + $0x228] sm:$0xff]
    %v509 = vld [vmem:[%s6 + $0x230] sm:$0xff]
    %v510 = vld [vmem:[%s6 + $0x238] sm:$0xff]
    %v511 = vld [vmem:[%s6 + $0x240] sm:$0xff]
    %v512 = vld [vmem:[%s6 + $0x248] sm:$0xff]
    %v513 = vld [vmem:[%s6 + $0x250] sm:$0xff]
    %v514 = vld [vmem:[%s6 + $0x258] sm:$0xff]
    %v515 = vld [vmem:[%s6 + $0x260] sm:$0xff]
    %v516 = vld [vmem:[%s6 + $0x268] sm:$0xff]
    %v517 = vld [vmem:[%s6 + $0x270] sm:$0xff]
    %v518 = vld [vmem:[%s6 + $0x278] sm:$0xff]
    %v519 = vld [vmem:[%s6 + $0x280] sm:$0xff]
    %v520 = vld [vmem:[%s6 + $0x288] sm:$0xff]
    %v521 = vld [vmem:[%s6 + $0x290] sm:$0xff]
    %v522 = vld [vmem:[%s6 + $0x298] sm:$0xff]
    %v523 = vld [vmem:[%s6 + $0x2a0] sm:$0xff]
    %v524 = vld [vmem:[%s6 + $0x2a8] sm:$0xff]
    %v525 = vld [vmem:[%s6 + $0x2b0] sm:$0xff]
    %v526 = vld [vmem:[%s6 + $0x2b8] sm:$0xff]
    %v527 = vld [vmem:[%s6 + $0x2c0] sm:$0xff]
    %v528 = vld [vmem:[%s6 + $0x2c8] sm:$0xff]
    %v529 = vld [vmem:[%s6 + $0x2d0] sm:$0xff]
    %v530 = vld [vmem:[%s6 + $0x2d8] sm:$0xff]
    %v531 = vld [vmem:[%s6 + $0x2e0] sm:$0xff]
    %v532 = vld [vmem:[%s6 + $0x2e8] sm:$0xff]
    %v533 = vld [vmem:[%s6 + $0x2f0] sm:$0xff]
    %v534 = vld [vmem:[%s6 + $0x2f8] sm:$0xff]
    %v535 = vld [vmem:[%s6 + $0x300] sm:$0xff]
    %v536 = vld [vmem:[%s6 + $0x308] sm:$0xff]
    %v537 = vld [vmem:[%s6 + $0x310] sm:$0xff]
    %v538 = vld [vmem:[%s6 + $0x318] sm:$0xff]
    %v539 = vld [vmem:[%s6 + $0x320] sm:$0xff]
    %v540 = vld [vmem:[%s6 + $0x328] sm:$0xff]
    %v541 = vld [vmem:[%s6 + $0x330] sm:$0xff]
    %v542 = vld [vmem:[%s6 + $0x338] sm:$0xff]
    %v543 = vld [vmem:[%s6 + $0x340] sm:$0xff]
    %v544 = vld [vmem:[%s6 + $0x348] sm:$0xff]
    %v545 = vld [vmem:[%s6 + $0x350] sm:$0xff]
    %v546 = vld [vmem:[%s6 + $0x358] sm:$0xff]
    %v547 = vld [vmem:[%s6 + $0x360] sm:$0xff]
    %v548 = vld [vmem:[%s6 + $0x368] sm:$0xff]
    %v549 = vld [vmem:[%s6 + $0x370] sm:$0xff]
    %v550 = vld [vmem:[%s6 + $0x378] sm:$0xff]
    %v551 = vld [vmem:[%s6 + $0x380] sm:$0xff]
    %v552 = vld [vmem:[%s6 + $0x388] sm:$0xff]
    %v553 = vld [vmem:[%s6 + $0x390] sm:$0xff]
    %v554 = vld [vmem:[%s6 + $0x398] sm:$0xff]
    %v555 = vld [vmem:[%s6 + $0x3a0] sm:$0xff]
    %v556 = vld [vmem:[%s6 + $0x3a8] sm:$0xff]
    %v557 = vld [vmem:[%s6 + $0x3b0] sm:$0xff]
    %v558 = vld [vmem:[%s6 + $0x3b8] sm:$0xff]
    %v559 = vld [vmem:[%s6 + $0x3c0] sm:$0xff]
    %v560 = vld [vmem:[%s6 + $0x3c8] sm:$0xff]
    %v561 = vld [vmem:[%s6 + $0x3d0] sm:$0xff]
    %v562 = vld [vmem:[%s6 + $0x3d8] sm:$0xff]
    %v563 = vld [vmem:[%s6 + $0x3e0] sm:$0xff]
    %v564 = vld [vmem:[%s6 + $0x3e8] sm:$0xff]
    %v565 = vld [vmem:[%s6 + $0x3f0] sm:$0xff]
    %v566 = vld [vmem:[%s6 + $0x3f8] sm:$0xff]
    %v567 = vld [vmem:[%s6 + $0x400] sm:$0xff]
    %v568 = vld [vmem:[%s6 + $0x408] sm:$0xff]
    %v569 = vld [vmem:[%s6 + $0x410] sm:$0xff]
    %v570 = vld [vmem:[%s6 + $0x418] sm:$0xff]
    %v571 = vld [vmem:[%s6 + $0x420] sm:$0xff]
    %v572 = vld [vmem:[%s6 + $0x428] sm:$0xff]
    %v573 = vld [vmem:[%s6 + $0x430] sm:$0xff]
    %v574 = vld [vmem:[%s6 + $0x438] sm:$0xff]
    %v575 = vld [vmem:[%s6 + $0x440] sm:$0xff]
    %v576 = vld [vmem:[%s6 + $0x448] sm:$0xff]
    %v577 = vld [vmem:[%s6 + $0x450] sm:$0xff]
    %v578 = vld [vmem:[%s6 + $0x458] sm:$0xff]
    %v579 = vld [vmem:[%s6 + $0x460] sm:$0xff]
    %v580 = vld [vmem:[%s6 + $0x468] sm:$0xff]
    %v581 = vld [vmem:[%s6 + $0x470] sm:$0xff]
    %v582 = vld [vmem:[%s6 + $0x478] sm:$0xff]
    %v583 = vld [vmem:[%s7] sm:$0x1]
    %v585 = vperm.slane %v583, 0
    %587 = vmatpush.msra.mxu0 %v454
    %588 = vmatpush.msra.mxu0 %v453
    %589 = vmatpush.msra.mxu0 %v452
    %590 = vmatpush.msra.mxu0 %v451
    %591 = vmatpush.msra.mxu0 %v450
    %592 = vmatpush.msra.mxu0 %v449
    %593 = vmatpush.msra.mxu0 %v448
    %594 = vmatpush.msra.mxu0 %v447
    %595 = vmatpush.msra.mxu0 %v446
    %596 = vmatpush.msra.mxu0 %v445
    %597 = vmatpush.msra.mxu0 %v444
    %598 = vmatpush.msra.mxu0 %v443
    %599 = vmatpush.msra.mxu0 %v442
    %600 = vmatpush.msra.mxu0 %v441
    %601 = vmatpush.msra.mxu0 %v440
    %602 = vmatpush.msra.mxu0 %v439
    %603 = vmatmul.f32.gmra.mxu0 %v430
    %v604 = vpop.f32.mrf.mxu0
    %v605 = vadd.f32 %v585, %v604
    %606 = vdwg.mxu0
    %607 = vmatpush.msra.mxu0 %v470
    %608 = vmatpush.msra.mxu0 %v469
    %609 = vmatpush.msra.mxu0 %v468
    %610 = vmatpush.msra.mxu0 %v467
    %611 = vmatpush.msra.mxu0 %v466
    %612 = vmatpush.msra.mxu0 %v465
    %613 = vmatpush.msra.mxu0 %v464
    %614 = vmatpush.msra.mxu0 %v463
    %615 = vmatpush.msra.mxu0 %v462
    %616 = vmatpush.msra.mxu0 %v461
    %617 = vmatpush.msra.mxu0 %v460
    %618 = vmatpush.msra.mxu0 %v459
    %619 = vmatpush.msra.mxu0 %v458
    %620 = vmatpush.msra.mxu0 %v457
    %621 = vmatpush.msra.mxu0 %v456
    %622 = vmatpush.msra.mxu0 %v455
    %623 = vmatmul.f32.gmra.mxu0 %v431
    %v624 = vpop.f32.mrf.mxu0
    %v625 = vadd.f32 %v605, %v624
    %626 = vdwg.mxu0
    %627 = vmatpush.msra.mxu0 %v486
    %628 = vmatpush.msra.mxu0 %v485
    %629 = vmatpush.msra.mxu0 %v484
    %630 = vmatpush.msra.mxu0 %v483
    %631 = vmatpush.msra.mxu0 %v482
    %632 = vmatpush.msra.mxu0 %v481
    %633 = vmatpush.msra.mxu0 %v480
    %634 = vmatpush.msra.mxu0 %v479
    %635 = vmatpush.msra.mxu0 %v478
    %636 = vmatpush.msra.mxu0 %v477
    %637 = vmatpush.msra.mxu0 %v476
    %638 = vmatpush.msra.mxu0 %v475
    %639 = vmatpush.msra.mxu0 %v474
    %640 = vmatpush.msra.mxu0 %v473
    %641 = vmatpush.msra.mxu0 %v472
    %642 = vmatpush.msra.mxu0 %v471
    %643 = vmatmul.f32.gmra.mxu0 %v432
    %v644 = vpop.f32.mrf.mxu0
    %v645 = vadd.f32 %v625, %v644
    %646 = vdwg.mxu0
    %647 = vmatpush.msra.mxu0 %v502
    %648 = vmatpush.msra.mxu0 %v501
    %649 = vmatpush.msra.mxu0 %v500
    %650 = vmatpush.msra.mxu0 %v499
    %651 = vmatpush.msra.mxu0 %v498
    %652 = vmatpush.msra.mxu0 %v497
    %653 = vmatpush.msra.mxu0 %v496
    %654 = vmatpush.msra.mxu0 %v495
    %655 = vmatpush.msra.mxu0 %v494
    %656 = vmatpush.msra.mxu0 %v493
    %657 = vmatpush.msra.mxu0 %v492
    %658 = vmatpush.msra.mxu0 %v491
    %659 = vmatpush.msra.mxu0 %v490
    %660 = vmatpush.msra.mxu0 %v489
    %661 = vmatpush.msra.mxu0 %v488
    %662 = vmatpush.msra.mxu0 %v487
    %663 = vmatmul.f32.gmra.mxu0 %v433
    %v664 = vpop.f32.mrf.mxu0
    %v665 = vadd.f32 %v645, %v664
    %666 = vdwg.mxu0
    %667 = vmatpush.msra.mxu0 %v518
    %668 = vmatpush.msra.mxu0 %v517
    %669 = vmatpush.msra.mxu0 %v516
    %670 = vmatpush.msra.mxu0 %v515
    %671 = vmatpush.msra.mxu0 %v514
    %672 = vmatpush.msra.mxu0 %v513
    %673 = vmatpush.msra.mxu0 %v512
    %674 = vmatpush.msra.mxu0 %v511
    %675 = vmatpush.msra.mxu0 %v510
    %676 = vmatpush.msra.mxu0 %v509
    %677 = vmatpush.msra.mxu0 %v508
    %678 = vmatpush.msra.mxu0 %v507
    %679 = vmatpush.msra.mxu0 %v506
    %680 = vmatpush.msra.mxu0 %v505
    %681 = vmatpush.msra.mxu0 %v504
    %682 = vmatpush.msra.mxu0 %v503
    %683 = vmatmul.f32.gmra.mxu0 %v434
    %v684 = vpop.f32.mrf.mxu0
    %v685 = vadd.f32 %v665, %v684
    %686 = vdwg.mxu0
    %687 = vmatpush.msra.mxu0 %v534
    %688 = vmatpush.msra.mxu0 %v533
    %689 = vmatpush.msra.mxu0 %v532
    %690 = vmatpush.msra.mxu0 %v531
    %691 = vmatpush.msra.mxu0 %v530
    %692 = vmatpush.msra.mxu0 %v529
    %693 = vmatpush.msra.mxu0 %v528
    %694 = vmatpush.msra.mxu0 %v527
    %695 = vmatpush.msra.mxu0 %v526
    %696 = vmatpush.msra.mxu0 %v525
    %697 = vmatpush.msra.mxu0 %v524
    %698 = vmatpush.msra.mxu0 %v523
    %699 = vmatpush.msra.mxu0 %v522
    %700 = vmatpush.msra.mxu0 %v521
    %701 = vmatpush.msra.mxu0 %v520
    %702 = vmatpush.msra.mxu0 %v519
    %703 = vmatmul.f32.gmra.mxu0 %v435
    %v704 = vpop.f32.mrf.mxu0
    %v705 = vadd.f32 %v685, %v704
    %706 = vdwg.mxu0
    %707 = vmatpush.msra.mxu0 %v550
    %708 = vmatpush.msra.mxu0 %v549
    %709 = vmatpush.msra.mxu0 %v548
    %710 = vmatpush.msra.mxu0 %v547
    %711 = vmatpush.msra.mxu0 %v546
    %712 = vmatpush.msra.mxu0 %v545
    %713 = vmatpush.msra.mxu0 %v544
    %714 = vmatpush.msra.mxu0 %v543
    %715 = vmatpush.msra.mxu0 %v542
    %716 = vmatpush.msra.mxu0 %v541
    %717 = vmatpush.msra.mxu0 %v540
    %718 = vmatpush.msra.mxu0 %v539
    %719 = vmatpush.msra.mxu0 %v538
    %720 = vmatpush.msra.mxu0 %v537
    %721 = vmatpush.msra.mxu0 %v536
    %722 = vmatpush.msra.mxu0 %v535
    %723 = vmatmul.f32.gmra.mxu0 %v436
    %v724 = vpop.f32.mrf.mxu0
    %v725 = vadd.f32 %v705, %v724
    %726 = vdwg.mxu0
    %727 = vmatpush.msra.mxu0 %v566
    %728 = vmatpush.msra.mxu0 %v565
    %729 = vmatpush.msra.mxu0 %v564
    %730 = vmatpush.msra.mxu0 %v563
    %731 = vmatpush.msra.mxu0 %v562
    %732 = vmatpush.msra.mxu0 %v561
    %733 = vmatpush.msra.mxu0 %v560
    %734 = vmatpush.msra.mxu0 %v559
    %735 = vmatpush.msra.mxu0 %v558
    %736 = vmatpush.msra.mxu0 %v557
    %737 = vmatpush.msra.mxu0 %v556
    %738 = vmatpush.msra.mxu0 %v555
    %739 = vmatpush.msra.mxu0 %v554
    %740 = vmatpush.msra.mxu0 %v553
    %741 = vmatpush.msra.mxu0 %v552
    %742 = vmatpush.msra.mxu0 %v551
    %743 = vmatmul.f32.gmra.mxu0 %v437
    %v744 = vpop.f32.mrf.mxu0
    %v745 = vadd.f32 %v725, %v744
    %746 = vdwg.mxu0
    %747 = vmatpush.msra.mxu0 %v582
    %748 = vmatpush.msra.mxu0 %v581
    %749 = vmatpush.msra.mxu0 %v580
    %750 = vmatpush.msra.mxu0 %v579
    %751 = vmatpush.msra.mxu0 %v578
    %752 = vmatpush.msra.mxu0 %v577
    %753 = vmatpush.msra.mxu0 %v576
    %754 = vmatpush.msra.mxu0 %v575
    %755 = vmatpush.msra.mxu0 %v574
    %756 = vmatpush.msra.mxu0 %v573
    %757 = vmatpush.msra.mxu0 %v572
    %758 = vmatpush.msra.mxu0 %v571
    %759 = vmatpush.msra.mxu0 %v570
    %760 = vmatpush.msra.mxu0 %v569
    %761 = vmatpush.msra.mxu0 %v568
    %762 = vmatpush.msra.mxu0 %v567
    %763 = vmatmul.f32.gmra.mxu0 %v438
    %v764 = vpop.f32.mrf.mxu0
    %v765 = vadd.f32 %v745, %v764
    %766 = vdwg.mxu0
    %v767 = vmax.f32 %v765, 0.0
    %v768 = vld [vmem:[%s8] sm:$0xff]
    %v769 = vld [vmem:[%s8 + $0x8] sm:$0xff]
    %v770 = vld [vmem:[%s8 + $0x10] sm:$0xff]
    %v771 = vld [vmem:[%s8 + $0x18] sm:$0xff]
    %v772 = vld [vmem:[%s8 + $0x20] sm:$0xff]
    %v773 = vld [vmem:[%s8 + $0x28] sm:$0xff]
    %v774 = vld [vmem:[%s8 + $0x30] sm:$0xff]
    %v775 = vld [vmem:[%s8 + $0x38] sm:$0xff]
    %v776 = vld [vmem:[%s9] sm:$0x3]
    %v778 = vperm.slane %v776, 0
    %v779 = vperm.slane %v776, 1
    %vm782 = vcmask 261120
    %v784 = vsel %vm782, %v767, 0
    %786 = vmatpush.msra.mxu0 0.0
    %787 = vmatpush.msra.mxu0 0.0
    %788 = vmatpush.msra.mxu0 0.0
    %789 = vmatpush.msra.mxu0 0.0
    %790 = vmatpush.msra.mxu0 0.0
    %791 = vmatpush.msra.mxu0 0.0
    %792 = vmatpush.msra.mxu0 0.0
    %793 = vmatpush.msra.mxu0 0.0
    %794 = vmatpush.msra.mxu0 0.0
    %795 = vmatpush.msra.mxu0 0.0
    %796 = vmatpush.msra.mxu0 0.0
    %797 = vmatpush.msra.mxu0 0.0
    %798 = vmatpush.msra.mxu0 %v774
    %799 = vmatpush.msra.mxu0 %v772
    %800 = vmatpush.msra.mxu0 %v770
    %801 = vmatpush.msra.mxu0 %v768
    %802 = vmatmul.f32.gmra.mxu0 %v784
    %v803 = vpop.f32.mrf.mxu0
    %v804 = vadd.f32 %v778, %v803
    %805 = vdwg.mxu0
    %806 = vmatpush.msra.mxu0 0.0
    %807 = vmatpush.msra.mxu0 0.0
    %808 = vmatpush.msra.mxu0 0.0
    %809 = vmatpush.msra.mxu0 0.0
    %810 = vmatpush.msra.mxu0 0.0
    %811 = vmatpush.msra.mxu0 0.0
    %812 = vmatpush.msra.mxu0 0.0
    %813 = vmatpush.msra.mxu0 0.0
    %814 = vmatpush.msra.mxu0 0.0
    %815 = vmatpush.msra.mxu0 0.0
    %816 = vmatpush.msra.mxu0 0.0
    %817 = vmatpush.msra.mxu0 0.0
    %818 = vmatpush.msra.mxu0 %v775
    %819 = vmatpush.msra.mxu0 %v773
    %820 = vmatpush.msra.mxu0 %v771
    %821 = vmatpush.msra.mxu0 %v769
    %822 = vmatmul.f32.gmra.mxu0 %v784
    %v823 = vpop.f32.mrf.mxu0
    %v824 = vadd.f32 %v779, %v823
    %825 = vdwg.mxu0
    %v826 = vxor.u32 %v804, 2147483648
    %v827 = vxor.u32 %v824, 2147483648
    %v828 = vmul.f32 %v826, 1.442695
    %v829 = vpow.pop %v828
    %v830 = vmul.f32 %v827, 1.442695
    %v831 = vpow.pop %v830
    %v832 = vadd.f32 %v829, 1.0
    %v833 = vadd.f32 %v831, 1.0
    %v834 = vrcp.pop %v832
    %v835 = vmul.f32 %v832, %v834
    %v836 = vsub.f32 1.0, %v835
    %v837 = vmul.f32 %v834, %v836
    %v838 = vadd.f32 %v834, %v837
    %vm839 = vweird.f32 %v832
    %vm840 = vweird.f32 %v834
    %vm841 = vmor %vm839, %vm840
    %v842 = vsel %vm841, %v834, %v838
    %v843 = vand.u32 2147483647, %v832
    %vm844 = vcmp.eq.f32.partialorder %v843, 8.507059e+37
    %v845 = vand.u32 %v832, 2147483648
    %v846 = vor.u32 1.1754944e-38, %v845
    %v847 = vsel %vm844, %v846, %v842
    %v848 = vmul.f32 1.0, %v847
    %v849 = vrcp.pop %v833
    %v850 = vmul.f32 %v833, %v849
    %v851 = vsub.f32 1.0, %v850
    %v852 = vmul.f32 %v849, %v851
    %v853 = vadd.f32 %v849, %v852
    %vm854 = vweird.f32 %v833
    %vm855 = vweird.f32 %v849
    %vm856 = vmor %vm854, %vm855
    %v857 = vsel %vm856, %v849, %v853
    %v858 = vand.u32 2147483647, %v833
    %vm859 = vcmp.eq.f32.partialorder %v858, 8.507059e+37
    %v860 = vand.u32 %v833, 2147483648
    %v861 = vor.u32 1.1754944e-38, %v860
    %v862 = vsel %vm859, %v861, %v857
    %v863 = vmul.f32 1.0, %v862
    %864 = vst [vmem:[#allocation6] sm:$0xff] %v848
    %865 = vst [vmem:[#allocation6 + $0x8] sm:$0xff] %v863
    // Predicated region
    $region34: #{tpu_custom_call.1} parent=1 // pred_check
      _
    $region35: #{tpu_custom_call.1} parent=1 // pred_check_branch
      %867 = sbr.rel (0) target = $region37
    $region36: #{tpu_custom_call.1} parent=1 // pred_region
      %869 = vsyncadd [#allocation7], 0
      %s871 = sshll.u32 [#allocation6], 4
      %s872 = int_to_ptr.vmem [resolvable:$true] %s871
      %s873 = sshll.u32 %s10, 4
      %s874 = int_to_ptr.hbm [resolvable:$true] %s873
      %876 = dma.vmem_to_hbm [thread:$0]  %s872, 256, %s874, [#allocation7]
    $region37: #{tpu_custom_call.1} parent=1 // pred_fallthru
      _
    // Predicated region
    $region38: #{tpu_custom_call.1} parent=1 // pred_check
      _
    $region39: #{tpu_custom_call.1} parent=1 // pred_check_branch
      %878 = sbr.rel (0) target = $region41
    $region40: #{tpu_custom_call.1} parent=1 // pred_region
      %880 = dma.done [#allocation7], 256
    $region41: #{tpu_custom_call.1} parent=1 // pred_fallthru
      _
    %881 = vsyncpa [#allocation7], 1

</llo_original>
